<compile_context>
chip_gen: v7x
topology: tpu7x:2x2x1
jax: 0.10.0
libtpu: 0.0.40
codegen_flags: <defaults>
</compile_context>

<pallas_src>
import functools
import math

import numpy as np
import jax
import jax.numpy as jnp
from jax.experimental import pallas as pl
from jax.experimental.pallas import tpu as pltpu

SEQ_LEN = 64


def _pad_lanes(x2d, pad):
    """Zero-pad a (C, L) tile along the lane (length) axis on both sides."""
    if pad == 0:
        return x2d
    z = jnp.zeros((x2d.shape[0], pad), x2d.dtype)
    return jnp.concatenate([z, x2d, z], axis=1)


def _im2col(samples, L, K, dilation, pad):
    """samples: list of per-sample (C, L) tiles.  Returns (K*C, B*L), tap-major rows and
    batch-major lane columns: element (t*C + c, b*L + l) == xpad_b[c, l + t*dilation]."""
    padded = [_pad_lanes(s, pad) for s in samples]
    taps = []
    for t in range(K):
        off = t * dilation
        shifted = [p[:, off:off + L] for p in padded]
        taps.append(shifted[0] if len(shifted) == 1 else jnp.concatenate(shifted, axis=1))
    return taps[0] if K == 1 else jnp.concatenate(taps, axis=0)


def _cnn_block_kernel(x_ref, w1_ref, b1_ref, w2_ref, b2_ref, wr_ref, br_ref, o_ref,
                      *, B, L, K, dilation, pad, has_resample, mxu_dtype):
    # x_ref : (B, Cin, L)        NCL batch tile (no wrapper transpose / pad)
    # w1_ref: (Clat, K*Cin)      conv1 weight, im2col layout  w1[o, t*Cin + i]
    # b1_ref: (Clat, 1)
    # w2_ref: (Cout, K*Clat)     conv2 weight, im2col layout
    # b2_ref: (Cout, 1)
    # wr_ref: (Cout, Cin)        1x1 resample weight (ignored if identity residual)
    # br_ref: (Cout, 1)
    # o_ref : (Cout, B*L)        lane-dense output tile (channels-first, batch on lanes)
    x_samples = [x_ref[b] for b in range(B)]                        # each (Cin, L) f32

    def dot32(a, b):
        return jnp.dot(a.astype(mxu_dtype), b.astype(mxu_dtype),
                       preferred_element_type=jnp.float32)

    # ---- cnn1: dilated conv as ONE im2col matmul + ReLU (Dropout == identity, eval) --
    cols1 = _im2col(x_samples, L, K, dilation, pad)                 # (K*Cin, B*L)
    h = jnp.maximum(dot32(w1_ref[...], cols1) + b1_ref[...], 0.0)   # (Clat, B*L)

    # ---- cnn2: dilated conv on the hidden activation (kept in vregs, no scratch) -----
    h_samples = [h[:, b * L:(b + 1) * L] for b in range(B)]
    cols2 = _im2col(h_samples, L, K, dilation, pad)                 # (K*Clat, B*L)
    y = jnp.maximum(dot32(w2_ref[...], cols2) + b2_ref[...], 0.0)   # (Cout, B*L)

    # ---- residual branch: 1x1 conv (pure channel matmul) or identity ----------------
    x_flat = x_samples[0] if B == 1 else jnp.concatenate(x_samples, axis=1)  # (Cin, B*L)
    if has_resample:
        res = dot32(wr_ref[...], x_flat) + br_ref[...]
    else:
        res = x_flat

    o_ref[...] = jnp.maximum(y + res, 0.0)                          # final ReLU ("output_elu")


def cnn_block_forward(x_ncl, params, *, kernel_size, dilation,
                      mxu_dtype=jnp.float32, batch_tile=None):
    """x_ncl: (N, C_in, L) float32 (PyTorch layout). Returns (N, C_out, L).

    mxu_dtype : jnp.float32 (exact) or jnp.bfloat16 (v6e/v7x fast MXU path, f32 accum).
    batch_tile: samples per grid step (default: whole batch in one step).  For large N
        on v7x, set batch_tile = N // 2 so the "parallel" batch axis splits across the
        two TensorCores.
    """
    N, Cin, L = x_ncl.shape
    span = dilation * (kernel_size - 1)
    # Same fragility as the PyTorch module: symmetric 'same' padding needs span even.
    assert span % 2 == 0, "dilation*(kernel_size-1) must be even for 'same' padding"
    pad = span >> 1

    w1, b1, w2, b2, wr, br = params
    Clat, Cout = w1.shape[0], w2.shape[0]
    has_resample = wr is not None
    if not has_resample:                                   # dummies (ignored in kernel)
        wr = jnp.zeros((Cout, Cin), jnp.float32)
        br = jnp.zeros((Cout, 1), jnp.float32)

    B = N if batch_tile is None else batch_tile
    assert N % B == 0, "batch_tile must divide the batch size"
    num_tiles = N // B

    kernel = functools.partial(
        _cnn_block_kernel, B=B, L=L, K=kernel_size, dilation=dilation, pad=pad,
        has_resample=has_resample, mxu_dtype=mxu_dtype)

    # Output is produced channels-first with the batch folded onto the lane axis:
    # (Cout, N*L); the out block's last dim (B*L) is a multiple of 128 -> unmasked vst.
    out_t = pl.pallas_call(
        kernel,
        out_shape=jax.ShapeDtypeStruct((Cout, N * L), jnp.float32),
        grid_spec=pltpu.PrefetchScalarGridSpec(
            num_scalar_prefetch=0,
            grid=(num_tiles,),
            in_specs=[
                pl.BlockSpec((B, Cin, L), lambda i: (i, 0, 0)),
                pl.BlockSpec((Clat, kernel_size * Cin), lambda i: (0, 0)),
                pl.BlockSpec((Clat, 1), lambda i: (0, 0)),
                pl.BlockSpec((Cout, kernel_size * Clat), lambda i: (0, 0)),
                pl.BlockSpec((Cout, 1), lambda i: (0, 0)),
                pl.BlockSpec((Cout, Cin), lambda i: (0, 0)),
                pl.BlockSpec((Cout, 1), lambda i: (0, 0)),
            ],
            out_specs=pl.BlockSpec((Cout, B * L), lambda i: (0, i)),
        ),
        compiler_params=pltpu.CompilerParams(
            dimension_semantics=("parallel",)),   # v7x: batch tiles split across 2 TCs
    )(x_ncl.astype(jnp.float32), w1, b1, w2, b2, wr, br)

    # (Cout, N*L) -> (N, Cout, L): the reshape is layout-preserving and the transpose is
    # a few-KB op fused by XLA (a downstream block could consume (Cout, N*L) directly).
    return jnp.transpose(out_t.reshape(Cout, N, L), (1, 0, 2))


def init_params(key, in_ch, out_ch, kernel_size):
    """Deterministic kaiming-normal init + weight_norm fold (matches CNNBlock.__init__)."""
    latent = (in_ch + out_ch) >> 1
    k1, k2, k3 = jax.random.split(key, 3)

    def kaiming_conv1d(k, out_c, in_c, ks):
        fan_in = in_c * ks
        std = 1.0 / math.sqrt(fan_in)                      # calculate_gain('conv1d') == 1
        return std * jax.random.normal(k, (out_c, in_c, ks), jnp.float32)

    def weight_norm_fold(v):
        # w = g * v/||v||_(in,k); g is initialized to ||v|| -> w == v, folded explicitly.
        nrm = jnp.sqrt(jnp.sum(v * v, axis=(1, 2), keepdims=True))
        return nrm * v / nrm

    w1_oik = weight_norm_fold(kaiming_conv1d(k1, latent, in_ch, kernel_size))
    w2_oik = weight_norm_fold(kaiming_conv1d(k2, out_ch, latent, kernel_size))
    b1 = jnp.zeros((latent,), jnp.float32)
    b2 = jnp.zeros((out_ch,), jnp.float32)

    if in_ch != out_ch:
        wr_oik = kaiming_conv1d(k3, out_ch, in_ch, 1)      # resample: 1x1 conv, zero bias
        br = jnp.zeros((out_ch,), jnp.float32)
    else:
        wr_oik, br = None, None

    # (O, I, K) -> (O, K*I): row o, column t*I+i matches the kernel's im2col row order.
    w1_im2col = jnp.transpose(w1_oik, (0, 2, 1)).reshape(latent, kernel_size * in_ch)
    w2_im2col = jnp.transpose(w2_oik, (0, 2, 1)).reshape(out_ch, kernel_size * latent)
    wr_mat = wr_oik[:, :, 0] if wr_oik is not None else None             # (Cout, Cin)

    kernel_params = (w1_im2col, b1.reshape(latent, 1),
                     w2_im2col, b2.reshape(out_ch, 1),
                     wr_mat, br.reshape(out_ch, 1) if br is not None else None)
    ref_params = (w1_oik, b1, w2_oik, b2, wr_oik, br)
    return kernel_params, ref_params


def ref_forward(x_ncl, ref_params, *, kernel_size, dilation):
    """Pure-JAX reference (eval-mode PyTorch semantics) for correctness checking."""
    w1, b1, w2, b2, wr, br = ref_params
    pad = (dilation * (kernel_size - 1)) >> 1

    def conv(x, w, b, d, p):
        y = jax.lax.conv_general_dilated(
            x, w, window_strides=(1,), padding=[(p, p)], rhs_dilation=(d,),
            dimension_numbers=('NCH', 'OIH', 'NCH'))
        return y + b.reshape(1, -1, 1)

    res = conv(x_ncl, wr, br, 1, 0) if wr is not None else x_ncl
    h = jax.nn.relu(conv(x_ncl, w1, b1, dilation, pad))
    y = jax.nn.relu(conv(h, w2, b2, dilation, pad))
    return jax.nn.relu(y + res)


if __name__ == "__main__":
    N, C_IN, C_OUT, KSIZE, DIL = 2, 8, 16, 3, 2
    L = SEQ_LEN

    key = jax.random.PRNGKey(0)
    kx, kp = jax.random.split(key)
    x = jax.random.normal(kx, (N, C_IN, L), jnp.float32)   # PyTorch NCL layout

    kernel_params, ref_params = init_params(kp, C_IN, C_OUT, KSIZE)

    ref = jax.block_until_ready(
        ref_forward(x, ref_params, kernel_size=KSIZE, dilation=DIL))

    # f32 MXU operands: exact path, tight tolerance against the f32 reference.
    fwd_f32 = jax.jit(functools.partial(
        cnn_block_forward, kernel_size=KSIZE, dilation=DIL))
    out = jax.block_until_ready(fwd_f32(x, kernel_params))
    np.testing.assert_allclose(np.asarray(out), np.asarray(ref), rtol=1e-3, atol=1e-3)

    # bf16 MXU operands (v6e/v7x fast MXU path), f32 accumulation: looser tolerance
    # because bf16 operand rounding (~2^-9 relative) compounds across the two convs.
    fwd_bf16 = jax.jit(functools.partial(
        cnn_block_forward, kernel_size=KSIZE, dilation=DIL, mxu_dtype=jnp.bfloat16))
    out_bf16 = jax.block_until_ready(fwd_bf16(x, kernel_params))
    np.testing.assert_allclose(np.asarray(out_bf16), np.asarray(ref), rtol=1e-1, atol=1e-1)

    print("KERNEL_OK")
</pallas_src>

<mosaic_0001>
module attributes {stable_mosaic.version = 11 : i64} {
  func.func @_cnn_block_kernel(%arg0: i32, %arg1: memref<2x8x64xf32, #tpu.memory_space<vmem>>, %arg2: memref<12x24xf32, #tpu.memory_space<vmem>>, %arg3: memref<12x1xf32, #tpu.memory_space<vmem>>, %arg4: memref<16x36xf32, #tpu.memory_space<vmem>>, %arg5: memref<16x1xf32, #tpu.memory_space<vmem>>, %arg6: memref<16x8xf32, #tpu.memory_space<vmem>>, %arg7: memref<16x1xf32, #tpu.memory_space<vmem>>, %arg8: memref<16x128xf32, #tpu.memory_space<vmem>>) attributes {dimension_semantics = [#tpu.dimension_semantics<parallel>], iteration_bounds = array<i64: 1>, scalar_prefetch = 0 : i64, scratch_operands = 0 : i64, tpu.core_type = #tpu.core_type<tc>, window_params = [{transform_indices = @transform_0, window_bounds = array<i64: 2, 8, 64>}, {pipeline_mode = #tpu.pipeline_mode<synchronous>, transform_indices = @transform_1, window_bounds = array<i64: 12, 24>}, {pipeline_mode = #tpu.pipeline_mode<synchronous>, transform_indices = @transform_2, window_bounds = array<i64: 12, 1>}, {pipeline_mode = #tpu.pipeline_mode<synchronous>, transform_indices = @transform_3, window_bounds = array<i64: 16, 36>}, {pipeline_mode = #tpu.pipeline_mode<synchronous>, transform_indices = @transform_4, window_bounds = array<i64: 16, 1>}, {pipeline_mode = #tpu.pipeline_mode<synchronous>, transform_indices = @transform_5, window_bounds = array<i64: 16, 8>}, {pipeline_mode = #tpu.pipeline_mode<synchronous>, transform_indices = @transform_6, window_bounds = array<i64: 16, 1>}, {transform_indices = @transform_7, window_bounds = array<i64: 16, 128>}]} {
    %c0 = arith.constant 0 : index
    %c0_0 = arith.constant 0 : index
    %c0_1 = arith.constant 0 : index
    %0 = vector.load %arg1[%c0, %c0_0, %c0_1] : memref<2x8x64xf32, #tpu.memory_space<vmem>>, vector<1x8x64xf32>
    %1 = vector.shape_cast %0 : vector<1x8x64xf32> to vector<8x64xf32>
    %c1 = arith.constant 1 : index
    %c0_2 = arith.constant 0 : index
    %c0_3 = arith.constant 0 : index
    %2 = vector.load %arg1[%c1, %c0_2, %c0_3] : memref<2x8x64xf32, #tpu.memory_space<vmem>>, vector<1x8x64xf32>
    %3 = vector.shape_cast %2 : vector<1x8x64xf32> to vector<8x64xf32>
    %cst = arith.constant 0.000000e+00 : f32
    %4 = vector.broadcast %cst : f32 to vector<8x2xf32>
    %5 = tpu.concatenate %4, %1, %4 in 1 : vector<8x2xf32>, vector<8x64xf32>, vector<8x2xf32> -> vector<8x68xf32>
    %cst_4 = arith.constant 0.000000e+00 : f32
    %6 = vector.broadcast %cst_4 : f32 to vector<8x2xf32>
    %7 = tpu.concatenate %6, %3, %6 in 1 : vector<8x2xf32>, vector<8x64xf32>, vector<8x2xf32> -> vector<8x68xf32>
    %8 = vector.extract_strided_slice %5 {offsets = [0, 0], sizes = [8, 64], strides = [1, 1]} : vector<8x68xf32> to vector<8x64xf32>
    %9 = vector.extract_strided_slice %7 {offsets = [0, 0], sizes = [8, 64], strides = [1, 1]} : vector<8x68xf32> to vector<8x64xf32>
    %10 = tpu.concatenate %8, %9 in 1 : vector<8x64xf32>, vector<8x64xf32> -> vector<8x128xf32>
    %11 = vector.extract_strided_slice %5 {offsets = [0, 2], sizes = [8, 64], strides = [1, 1]} : vector<8x68xf32> to vector<8x64xf32>
    %12 = vector.extract_strided_slice %7 {offsets = [0, 2], sizes = [8, 64], strides = [1, 1]} : vector<8x68xf32> to vector<8x64xf32>
    %13 = tpu.concatenate %11, %12 in 1 : vector<8x64xf32>, vector<8x64xf32> -> vector<8x128xf32>
    %14 = vector.extract_strided_slice %5 {offsets = [0, 4], sizes = [8, 64], strides = [1, 1]} : vector<8x68xf32> to vector<8x64xf32>
    %15 = vector.extract_strided_slice %7 {offsets = [0, 4], sizes = [8, 64], strides = [1, 1]} : vector<8x68xf32> to vector<8x64xf32>
    %16 = tpu.concatenate %14, %15 in 1 : vector<8x64xf32>, vector<8x64xf32> -> vector<8x128xf32>
    %17 = tpu.concatenate %10, %13, %16 in 0 : vector<8x128xf32>, vector<8x128xf32>, vector<8x128xf32> -> vector<24x128xf32>
    %c0_5 = arith.constant 0 : index
    %c0_6 = arith.constant 0 : index
    %18 = vector.load %arg2[%c0_5, %c0_6] : memref<12x24xf32, #tpu.memory_space<vmem>>, vector<12x24xf32>
    %cst_7 = arith.constant dense<0.000000e+00> : vector<12x128xf32>
    %19 = tpu.matmul %18, %17, %cst_7 {dimension_numbers = #tpu.dot_dimension_numbers<[1], [0], [0], [1], [0, 0, 1, 1], [], []>} : vector<12x24xf32>, vector<24x128xf32>, vector<12x128xf32> -> vector<12x128xf32>
    %c0_8 = arith.constant 0 : index
    %c0_9 = arith.constant 0 : index
    %20 = vector.load %arg3[%c0_8, %c0_9] : memref<12x1xf32, #tpu.memory_space<vmem>>, vector<12x1xf32>
    %21 = vector.broadcast %20 : vector<12x1xf32> to vector<12x128xf32>
    %22 = arith.addf %19, %21 : vector<12x128xf32>
    %cst_10 = arith.constant 0.000000e+00 : f32
    %23 = vector.broadcast %cst_10 : f32 to vector<12x128xf32>
    %24 = arith.maximumf %22, %23 : vector<12x128xf32>
    %25 = vector.extract_strided_slice %24 {offsets = [0, 0], sizes = [12, 64], strides = [1, 1]} : vector<12x128xf32> to vector<12x64xf32>
    %26 = vector.extract_strided_slice %24 {offsets = [0, 64], sizes = [12, 64], strides = [1, 1]} : vector<12x128xf32> to vector<12x64xf32>
    %cst_11 = arith.constant 0.000000e+00 : f32
    %27 = vector.broadcast %cst_11 : f32 to vector<12x2xf32>
    %28 = tpu.concatenate %27, %25, %27 in 1 : vector<12x2xf32>, vector<12x64xf32>, vector<12x2xf32> -> vector<12x68xf32>
    %cst_12 = arith.constant 0.000000e+00 : f32
    %29 = vector.broadcast %cst_12 : f32 to vector<12x2xf32>
    %30 = tpu.concatenate %29, %26, %29 in 1 : vector<12x2xf32>, vector<12x64xf32>, vector<12x2xf32> -> vector<12x68xf32>
    %31 = vector.extract_strided_slice %28 {offsets = [0, 0], sizes = [12, 64], strides = [1, 1]} : vector<12x68xf32> to vector<12x64xf32>
    %32 = vector.extract_strided_slice %30 {offsets = [0, 0], sizes = [12, 64], strides = [1, 1]} : vector<12x68xf32> to vector<12x64xf32>
    %33 = tpu.concatenate %31, %32 in 1 : vector<12x64xf32>, vector<12x64xf32> -> vector<12x128xf32>
    %34 = vector.extract_strided_slice %28 {offsets = [0, 2], sizes = [12, 64], strides = [1, 1]} : vector<12x68xf32> to vector<12x64xf32>
    %35 = vector.extract_strided_slice %30 {offsets = [0, 2], sizes = [12, 64], strides = [1, 1]} : vector<12x68xf32> to vector<12x64xf32>
    %36 = tpu.concatenate %34, %35 in 1 : vector<12x64xf32>, vector<12x64xf32> -> vector<12x128xf32>
    %37 = vector.extract_strided_slice %28 {offsets = [0, 4], sizes = [12, 64], strides = [1, 1]} : vector<12x68xf32> to vector<12x64xf32>
    %38 = vector.extract_strided_slice %30 {offsets = [0, 4], sizes = [12, 64], strides = [1, 1]} : vector<12x68xf32> to vector<12x64xf32>
    %39 = tpu.concatenate %37, %38 in 1 : vector<12x64xf32>, vector<12x64xf32> -> vector<12x128xf32>
    %40 = tpu.concatenate %33, %36, %39 in 0 : vector<12x128xf32>, vector<12x128xf32>, vector<12x128xf32> -> vector<36x128xf32>
    %c0_13 = arith.constant 0 : index
    %c0_14 = arith.constant 0 : index
    %41 = vector.load %arg4[%c0_13, %c0_14] : memref<16x36xf32, #tpu.memory_space<vmem>>, vector<16x36xf32>
    %cst_15 = arith.constant dense<0.000000e+00> : vector<16x128xf32>
    %42 = tpu.matmul %41, %40, %cst_15 {dimension_numbers = #tpu.dot_dimension_numbers<[1], [0], [0], [1], [0, 0, 1, 1], [], []>} : vector<16x36xf32>, vector<36x128xf32>, vector<16x128xf32> -> vector<16x128xf32>
    %c0_16 = arith.constant 0 : index
    %c0_17 = arith.constant 0 : index
    %43 = vector.load %arg5[%c0_16, %c0_17] : memref<16x1xf32, #tpu.memory_space<vmem>>, vector<16x1xf32>
    %44 = vector.broadcast %43 : vector<16x1xf32> to vector<16x128xf32>
    %45 = arith.addf %42, %44 : vector<16x128xf32>
    %cst_18 = arith.constant 0.000000e+00 : f32
    %46 = vector.broadcast %cst_18 : f32 to vector<16x128xf32>
    %47 = arith.maximumf %45, %46 : vector<16x128xf32>
    %48 = tpu.concatenate %1, %3 in 1 : vector<8x64xf32>, vector<8x64xf32> -> vector<8x128xf32>
    %c0_19 = arith.constant 0 : index
    %c0_20 = arith.constant 0 : index
    %49 = vector.load %arg6[%c0_19, %c0_20] : memref<16x8xf32, #tpu.memory_space<vmem>>, vector<16x8xf32>
    %cst_21 = arith.constant dense<0.000000e+00> : vector<16x128xf32>
    %50 = tpu.matmul %49, %48, %cst_21 {dimension_numbers = #tpu.dot_dimension_numbers<[1], [0], [0], [1], [0, 0, 1, 1], [], []>} : vector<16x8xf32>, vector<8x128xf32>, vector<16x128xf32> -> vector<16x128xf32>
    %c0_22 = arith.constant 0 : index
    %c0_23 = arith.constant 0 : index
    %51 = vector.load %arg7[%c0_22, %c0_23] : memref<16x1xf32, #tpu.memory_space<vmem>>, vector<16x1xf32>
    %52 = vector.broadcast %51 : vector<16x1xf32> to vector<16x128xf32>
    %53 = arith.addf %50, %52 : vector<16x128xf32>
    %54 = arith.addf %47, %53 : vector<16x128xf32>
    %cst_24 = arith.constant 0.000000e+00 : f32
    %55 = vector.broadcast %cst_24 : f32 to vector<16x128xf32>
    %56 = arith.maximumf %54, %55 : vector<16x128xf32>
    %c0_25 = arith.constant 0 : index
    %c0_26 = arith.constant 0 : index
    %57 = vector.load %arg8[%c0_25, %c0_26] : memref<16x128xf32, #tpu.memory_space<vmem>>, vector<16x128xf32>
    tpu.vector_store %arg8[%c0_25, %c0_26], %56 {strides = array<i32>} : memref<16x128xf32, #tpu.memory_space<vmem>>, vector<16x128xf32>,
    return
  }
  func.func @transform_0(%arg0: i32) -> (i32, i32, i32) {
    %c0_i32 = arith.constant 0 : i32
    %c0_i32_0 = arith.constant 0 : i32
    %c0_i32_1 = arith.constant 0 : i32
    return %arg0, %c0_i32, %c0_i32_0 : i32, i32, i32
  }
  func.func @transform_1(%arg0: i32) -> (i32, i32) {
    %c0_i32 = arith.constant 0 : i32
    %c0_i32_0 = arith.constant 0 : i32
    %c0_i32_1 = arith.constant 0 : i32
    return %c0_i32, %c0_i32_0 : i32, i32
  }
  func.func @transform_2(%arg0: i32) -> (i32, i32) {
    %c0_i32 = arith.constant 0 : i32
    %c0_i32_0 = arith.constant 0 : i32
    %c0_i32_1 = arith.constant 0 : i32
    return %c0_i32, %c0_i32_0 : i32, i32
  }
  func.func @transform_3(%arg0: i32) -> (i32, i32) {
    %c0_i32 = arith.constant 0 : i32
    %c0_i32_0 = arith.constant 0 : i32
    %c0_i32_1 = arith.constant 0 : i32
    return %c0_i32, %c0_i32_0 : i32, i32
  }
  func.func @transform_4(%arg0: i32) -> (i32, i32) {
    %c0_i32 = arith.constant 0 : i32
    %c0_i32_0 = arith.constant 0 : i32
    %c0_i32_1 = arith.constant 0 : i32
    return %c0_i32, %c0_i32_0 : i32, i32
  }
  func.func @transform_5(%arg0: i32) -> (i32, i32) {
    %c0_i32 = arith.constant 0 : i32
    %c0_i32_0 = arith.constant 0 : i32
    %c0_i32_1 = arith.constant 0 : i32
    return %c0_i32, %c0_i32_0 : i32, i32
  }
  func.func @transform_6(%arg0: i32) -> (i32, i32) {
    %c0_i32 = arith.constant 0 : i32
    %c0_i32_0 = arith.constant 0 : i32
    %c0_i32_1 = arith.constant 0 : i32
    return %c0_i32, %c0_i32_0 : i32, i32
  }
  func.func @transform_7(%arg0: i32) -> (i32, i32) {
    %c0_i32 = arith.constant 0 : i32
    %c0_i32_0 = arith.constant 0 : i32
    return %c0_i32, %arg0 : i32, i32
  }
}

</mosaic_0001>

<llo_original>
// kernel: cnn_block_forward.1
$region0: #{cnn_block_forward.1}
  #allocation0 [shape = 'u32[]', space=smem, size = 0x4, offset = 0x4, fixed_abs, tag = 'smem constant byte address 0x4 - core index']
  #allocation1 [shape = 'u32[144,128]{1,0:T(1,128)}', space=vmem, size = 0x12000, scoped, tag = 'internal scratch']
  %s0 = inlined_call_operand.vmem [shape: f32[2,8,64], index: 0, kind: input, shape index: {}]
  %s1 = inlined_call_operand.vmem [shape: f32[12,24], index: 1, kind: input, shape index: {}]
  %s2 = inlined_call_operand.vmem [shape: f32[12,1], index: 2, kind: input, shape index: {}]
  %s3 = inlined_call_operand.vmem [shape: f32[16,36], index: 3, kind: input, shape index: {}]
  %s4 = inlined_call_operand.vmem [shape: f32[16,1], index: 4, kind: input, shape index: {}]
  %s5 = inlined_call_operand.vmem [shape: f32[16,8], index: 5, kind: input, shape index: {}]
  %s6 = inlined_call_operand.vmem [shape: f32[16,1], index: 6, kind: input, shape index: {}]
  %s7 = inlined_call_operand.vmem [shape: f32[16,128], index: 7, kind: output, shape index: {}]
  %s8 = sld [smem:[#allocation0]]
  $region38: #{cnn_block_forward.1} parent=0
    _
  %s10 = ssub.s32 1, %s8
  %s11 = scalar_select 0, %s10, %s8
  // Predicated region
  $region2: #{cnn_block_forward.1} parent=0 // pred_check
    _
  $region3: #{cnn_block_forward.1} parent=0 // pred_check_branch
    %13 = sbr.rel (0) target = $region5
  $region4: #{cnn_block_forward.1} parent=0 // pred_region
    _
  $region5: #{cnn_block_forward.1} parent=0 // pred_fallthru
    _
  // Predicated region
  $region6: #{cnn_block_forward.1} parent=0 // pred_check
    _
  $region7: #{cnn_block_forward.1} parent=0 // pred_check_branch
    %15 = sbr.rel (0) target = $region9
  $region8: #{cnn_block_forward.1} parent=0 // pred_region
    _
  $region9: #{cnn_block_forward.1} parent=0 // pred_fallthru
    _
  // Predicated region
  $region10: #{cnn_block_forward.1} parent=0 // pred_check
    _
  $region11: #{cnn_block_forward.1} parent=0 // pred_check_branch
    %17 = sbr.rel (0) target = $region13
  $region12: #{cnn_block_forward.1} parent=0 // pred_region
    _
  $region13: #{cnn_block_forward.1} parent=0 // pred_fallthru
    _
  // Predicated region
  $region14: #{cnn_block_forward.1} parent=0 // pred_check
    _
  $region15: #{cnn_block_forward.1} parent=0 // pred_check_branch
    %19 = sbr.rel (0) target = $region17
  $region16: #{cnn_block_forward.1} parent=0 // pred_region
    _
  $region17: #{cnn_block_forward.1} parent=0 // pred_fallthru
    _
  // Predicated region
  $region18: #{cnn_block_forward.1} parent=0 // pred_check
    _
  $region19: #{cnn_block_forward.1} parent=0 // pred_check_branch
    %21 = sbr.rel (0) target = $region21
  $region20: #{cnn_block_forward.1} parent=0 // pred_region
    _
  $region21: #{cnn_block_forward.1} parent=0 // pred_fallthru
    _
  // Predicated region
  $region22: #{cnn_block_forward.1} parent=0 // pred_check
    _
  $region23: #{cnn_block_forward.1} parent=0 // pred_check_branch
    %23 = sbr.rel (0) target = $region25
  $region24: #{cnn_block_forward.1} parent=0 // pred_region
    _
  $region25: #{cnn_block_forward.1} parent=0 // pred_fallthru
    _
  // Predicated region
  $region26: #{cnn_block_forward.1} parent=0 // pred_check
    _
  $region27: #{cnn_block_forward.1} parent=0 // pred_check_branch
    %25 = sbr.rel (0) target = $region29
  $region28: #{cnn_block_forward.1} parent=0 // pred_region
    _
  $region29: #{cnn_block_forward.1} parent=0 // pred_fallthru
    _
  %v26 = vld [vmem:[%s0] sm:$0xff]
  %s27 = scalar_lea.vmem %s0, 8
  %v28 = vld [vmem:[%s27] sm:$0xff]
  %30 = vrot.lane.b32.xlu0 %v26, 2
  %v31 = vpop.permute.xlu0 %30
  %vm33 = vcmask 15360
  %v34 = vsel %vm33, 0.0, %v31
  %vm35 = vcmask 539648
  %v36 = vsel %vm35, %v34, 0.0
  %38 = vrot.lane.b32.xlu0 %v28, 2
  %v39 = vpop.permute.xlu0 %38
  %v41 = vsel %vm33, 0.0, %v39
  %v42 = vsel %vm35, %v41, 0.0
  %44 = vrot.lane.b32.xlu0 %v42, 64
  %v45 = vpop.permute.xlu0 %44
  %vm47 = vcmask 523264
  %v48 = vsel %vm47, %v36, %v45
  %50 = vrot.lane.b32.xlu0 %v36, 126
  %v51 = vpop.permute.xlu0 %50
  %53 = vrot.lane.b32.xlu0 %v42, 62
  %v54 = vpop.permute.xlu0 %53
  %v56 = vsel %vm47, %v51, %v54
  %57 = vrot.lane.b32.xlu0 %v36, 124
  %v58 = vpop.permute.xlu0 %57
  %60 = vrot.lane.b32.xlu0 %v42, 60
  %v61 = vpop.permute.xlu0 %60
  %v63 = vsel %vm47, %v58, %v61
  %v64 = vld [vmem:[%s1] sm:$0xff]
  %v65 = vld [vmem:[%s1 + $0x8] sm:$0xf]
  %v66 = vld [vmem:[%s2] sm:$0xff]
  %v67 = vld [vmem:[%s2 + $0x8] sm:$0xf]
  %69 = vset.pattern.permute.xlu0 0
  %70 = vperm.xlu0 %69, %v66
  %v71 = vpop.permute.xlu0 %70
  %74 = vset.pattern.permute.xlu0 0
  %75 = vperm.xlu0 %74, %v67
  %v76 = vpop.permute.xlu0 %75
  %vm78 = vcmask 195584
  %v80 = vsel %vm78, %v64, 0
  %v83 = vsel %vm78, %v65, 0
  %85 = vmatprep.subr.mxu0 0.0
  %86 = vmatpush1.msra.mxu0 %v48
  %87 = vmatprep.subr.mxu0 0.0
  %88 = vmatpush1.msra.mxu0 %v56
  %89 = vmatprep.subr.mxu0 0.0
  %90 = vmatpush1.msra.mxu0 %v63
  %91 = vmatprep.subr.mxu0 0.0
  %92 = vmatpush1.msra.mxu0 0.0
  %93 = vmatprep.subr.mxu0 0.0
  %94 = vmatpush1.msra.mxu0 0.0
  %95 = vmatprep.subr.mxu0 0.0
  %96 = vmatpush1.msra.mxu0 0.0
  %97 = vmatprep.subr.mxu0 0.0
  %98 = vmatpush1.msra.mxu0 0.0
  %99 = vmatprep.subr.mxu0 0.0
  %100 = vmatpush1.msra.mxu0 0.0
  %101 = vmatprep.subr.mxu0 0.0
  %102 = vmatpush1.msra.mxu0 0.0
  %103 = vmatprep.subr.mxu0 0.0
  %104 = vmatpush1.msra.mxu0 0.0
  %105 = vmatprep.subr.mxu0 0.0
  %106 = vmatpush1.msra.mxu0 0.0
  %107 = vmatprep.subr.mxu0 0.0
  %108 = vmatpush1.msra.mxu0 0.0
  %109 = vmatprep.subr.mxu0 0.0
  %110 = vmatpush1.msra.mxu0 0.0
  %111 = vmatprep.subr.mxu0 0.0
  %112 = vmatpush1.msra.mxu0 0.0
  %113 = vmatprep.subr.mxu0 0.0
  %114 = vmatpush1.msra.mxu0 0.0
  %115 = vmatprep.subr.mxu0 0.0
  %116 = vmatpush1.msra.mxu0 0.0
  %117 = vmatprep.subr.mxu0 0.0
  %118 = vmatpush1.msra.mxu0 0.0
  %119 = vmatprep.subr.mxu0 0.0
  %120 = vmatpush1.msra.mxu0 0.0
  %121 = vmatprep.subr.mxu0 0.0
  %122 = vmatpush1.msra.mxu0 0.0
  %123 = vmatprep.subr.mxu0 0.0
  %124 = vmatpush1.msra.mxu0 0.0
  %125 = vmatprep.subr.mxu0 0.0
  %126 = vmatpush1.msra.mxu0 0.0
  %127 = vmatprep.subr.mxu0 0.0
  %128 = vmatpush1.msra.mxu0 0.0
  %129 = vmatprep.subr.mxu0 0.0
  %130 = vmatpush1.msra.mxu0 0.0
  %131 = vmatprep.subr.mxu0 0.0
  %132 = vmatpush1.msra.mxu0 0.0
  %133 = vmatprep.subr.mxu0 0.0
  %134 = vmatpush1.msra.mxu0 0.0
  %135 = vmatprep.subr.mxu0 0.0
  %136 = vmatpush1.msra.mxu0 0.0
  %137 = vmatprep.subr.mxu0 0.0
  %138 = vmatpush1.msra.mxu0 0.0
  %139 = vmatprep.subr.mxu0 0.0
  %140 = vmatpush1.msra.mxu0 0.0
  %141 = vmatprep.subr.mxu0 0.0
  %142 = vmatpush1.msra.mxu0 0.0
  %143 = vmatprep.subr.mxu0 0.0
  %144 = vmatpush1.msra.mxu0 0.0
  %145 = vmatprep.subr.mxu0 0.0
  %146 = vmatpush1.msra.mxu0 0.0
  %147 = vmatprep.subr.mxu0 0.0
  %148 = vmatpush1.msra.mxu0 0.0
  %149 = vmatprep.mubr.f32.mxu0 0.0
  %150 = vmatmul.mubr.f32.gmra.mrb[0].mxu0 %v80
  %v151 = vpop.f32.mrb[0].mxu0
  %v152 = vadd.f32 %v71, %v151
  %v153 = vpop.f32.mrb[0].mxu0
  %154 = vmatprep.mubr.f32.mxu0 0.0
  %155 = vmatmul.mubr.f32.gmra.mrb[0].mxu0 %v83
  %v156 = vpop.f32.mrb[0].mxu0
  %v157 = vadd.f32 %v76, %v156
  %v158 = vpop.f32.mrb[0].mxu0
  %159 = vdwg.mxu0
  %v160 = vmax.f32 %v152, 0.0
  %v161 = vmax.f32 %v157, 0.0
  %164 = vrot.lane.b32.xlu0 %v160, 2
  %v165 = vpop.permute.xlu0 %164
  %166 = vrot.lane.b32.xlu0 %v161, 2
  %v167 = vpop.permute.xlu0 %166
  %v170 = vsel %vm33, 0.0, %v165
  %v171 = vsel %vm33, 0.0, %v167
  %v172 = vsel %vm35, %v170, 0.0
  %v173 = vsel %vm35, %v171, 0.0
  %174 = vrot.lane.b32.xlu0 %v160, 66
  %v175 = vpop.permute.xlu0 %174
  %176 = vrot.lane.b32.xlu0 %v161, 66
  %v177 = vpop.permute.xlu0 %176
  %v180 = vsel %vm33, 0.0, %v175
  %v181 = vsel %vm33, 0.0, %v177
  %v182 = vsel %vm35, %v180, 0.0
  %v183 = vsel %vm35, %v181, 0.0
  %186 = vrot.lane.b32.xlu0 %v182, 64
  %v187 = vpop.permute.xlu0 %186
  %188 = vrot.lane.b32.xlu0 %v183, 64
  %v189 = vpop.permute.xlu0 %188
  %v192 = vsel %vm47, %v172, %v187
  %v193 = vsel %vm47, %v173, %v189
  %196 = vrot.lane.b32.xlu0 %v172, 126
  %v197 = vpop.permute.xlu0 %196
  %198 = vrot.lane.b32.xlu0 %v173, 126
  %v199 = vpop.permute.xlu0 %198
  %202 = vrot.lane.b32.xlu0 %v182, 62
  %v203 = vpop.permute.xlu0 %202
  %204 = vrot.lane.b32.xlu0 %v183, 62
  %v205 = vpop.permute.xlu0 %204
  %v208 = vsel %vm47, %v197, %v203
  %v209 = vsel %vm47, %v199, %v205
  %210 = vrot.lane.b32.xlu0 %v172, 124
  %v211 = vpop.permute.xlu0 %210
  %212 = vrot.lane.b32.xlu0 %v173, 124
  %v213 = vpop.permute.xlu0 %212
  %216 = vrot.lane.b32.xlu0 %v182, 60
  %v217 = vpop.permute.xlu0 %216
  %218 = vrot.lane.b32.xlu0 %v183, 60
  %v219 = vpop.permute.xlu0 %218
  %v222 = vsel %vm47, %v211, %v217
  %v223 = vsel %vm47, %v213, %v219
  %vm226 = vcmask 1043456
  %v227 = vrot.slane %v208, 4
  %v228 = vrot.slane %v209, 4
  %v229 = vsel %vm226, %v227, %v228
  %v232 = vsel %vm226, %v193, %v227
  %v233 = vld [vmem:[%s3] sm:$0xff]
  %v234 = vld [vmem:[%s3 + $0x8] sm:$0xff]
  %v235 = vld [vmem:[%s4] sm:$0xff]
  %v236 = vld [vmem:[%s4 + $0x8] sm:$0xff]
  %238 = vset.pattern.permute.xlu0 0
  %239 = vperm.xlu0 %238, %v235
  %v240 = vpop.permute.xlu0 %239
  %243 = vset.pattern.permute.xlu0 0
  %244 = vperm.xlu0 %243, %v236
  %v245 = vpop.permute.xlu0 %244
  %vm247 = vcmask 293888
  %v249 = vsel %vm247, %v233, 0
  %v252 = vsel %vm247, %v234, 0
  %v255 = vsel %vm226, %v223, 0
  %257 = vmatprep.subr.mxu0 0.0
  %258 = vmatpush1.msra.mxu0 %v192
  %259 = vmatprep.subr.mxu0 0.0
  %260 = vmatpush1.msra.mxu0 %v232
  %261 = vmatprep.subr.mxu0 0.0
  %262 = vmatpush1.msra.mxu0 %v229
  %263 = vmatprep.subr.mxu0 0.0
  %264 = vmatpush1.msra.mxu0 %v222
  %265 = vmatprep.subr.mxu0 0.0
  %266 = vmatpush1.msra.mxu0 %v255
  %267 = vmatprep.subr.mxu0 0.0
  %268 = vmatpush1.msra.mxu0 0.0
  %269 = vmatprep.subr.mxu0 0.0
  %270 = vmatpush1.msra.mxu0 0.0
  %271 = vmatprep.subr.mxu0 0.0
  %272 = vmatpush1.msra.mxu0 0.0
  %273 = vmatprep.subr.mxu0 0.0
  %274 = vmatpush1.msra.mxu0 0.0
  %275 = vmatprep.subr.mxu0 0.0
  %276 = vmatpush1.msra.mxu0 0.0
  %277 = vmatprep.subr.mxu0 0.0
  %278 = vmatpush1.msra.mxu0 0.0
  %279 = vmatprep.subr.mxu0 0.0
  %280 = vmatpush1.msra.mxu0 0.0
  %281 = vmatprep.subr.mxu0 0.0
  %282 = vmatpush1.msra.mxu0 0.0
  %283 = vmatprep.subr.mxu0 0.0
  %284 = vmatpush1.msra.mxu0 0.0
  %285 = vmatprep.subr.mxu0 0.0
  %286 = vmatpush1.msra.mxu0 0.0
  %287 = vmatprep.subr.mxu0 0.0
  %288 = vmatpush1.msra.mxu0 0.0
  %289 = vmatprep.subr.mxu0 0.0
  %290 = vmatpush1.msra.mxu0 0.0
  %291 = vmatprep.subr.mxu0 0.0
  %292 = vmatpush1.msra.mxu0 0.0
  %293 = vmatprep.subr.mxu0 0.0
  %294 = vmatpush1.msra.mxu0 0.0
  %295 = vmatprep.subr.mxu0 0.0
  %296 = vmatpush1.msra.mxu0 0.0
  %297 = vmatprep.subr.mxu0 0.0
  %298 = vmatpush1.msra.mxu0 0.0
  %299 = vmatprep.subr.mxu0 0.0
  %300 = vmatpush1.msra.mxu0 0.0
  %301 = vmatprep.subr.mxu0 0.0
  %302 = vmatpush1.msra.mxu0 0.0
  %303 = vmatprep.subr.mxu0 0.0
  %304 = vmatpush1.msra.mxu0 0.0
  %305 = vmatprep.subr.mxu0 0.0
  %306 = vmatpush1.msra.mxu0 0.0
  %307 = vmatprep.subr.mxu0 0.0
  %308 = vmatpush1.msra.mxu0 0.0
  %309 = vmatprep.subr.mxu0 0.0
  %310 = vmatpush1.msra.mxu0 0.0
  %311 = vmatprep.subr.mxu0 0.0
  %312 = vmatpush1.msra.mxu0 0.0
  %313 = vmatprep.subr.mxu0 0.0
  %314 = vmatpush1.msra.mxu0 0.0
  %315 = vmatprep.subr.mxu0 0.0
  %316 = vmatpush1.msra.mxu0 0.0
  %317 = vmatprep.subr.mxu0 0.0
  %318 = vmatpush1.msra.mxu0 0.0
  %319 = vmatprep.subr.mxu0 0.0
  %320 = vmatpush1.msra.mxu0 0.0
  %321 = vmatprep.mubr.f32.mxu0 0.0
  %322 = vmatmul.mubr.f32.gmra.mrb[0].mxu0 %v249
  %v323 = vpop.f32.mrb[0].mxu0
  %v324 = vadd.f32 %v240, %v323
  %v325 = vpop.f32.mrb[0].mxu0
  %326 = vmatprep.mubr.f32.mxu0 0.0
  %327 = vmatmul.mubr.f32.gmra.mrb[0].mxu0 %v252
  %v328 = vpop.f32.mrb[0].mxu0
  %v329 = vadd.f32 %v245, %v328
  %v330 = vpop.f32.mrb[0].mxu0
  %331 = vdwg.mxu0
  %v332 = vmax.f32 %v324, 0.0
  %v333 = vmax.f32 %v329, 0.0
  %334 = vrot.lane.b32.xlu0 %v28, 64
  %v335 = vpop.permute.xlu0 %334
  %v337 = vsel %vm47, %v26, %v335
  %v338 = vld [vmem:[%s5] sm:$0xff]
  %v339 = vld [vmem:[%s5 + $0x8] sm:$0xff]
  %v340 = vld [vmem:[%s6] sm:$0xff]
  %v341 = vld [vmem:[%s6 + $0x8] sm:$0xff]
  %343 = vset.pattern.permute.xlu0 0
  %344 = vperm.xlu0 %343, %v340
  %v345 = vpop.permute.xlu0 %344
  %348 = vset.pattern.permute.xlu0 0
  %349 = vperm.xlu0 %348, %v341
  %v350 = vpop.permute.xlu0 %349
  %vm352 = vcmask 64512
  %v354 = vsel %vm352, %v338, 0
  %v357 = vsel %vm352, %v339, 0
  %359 = vmatprep.subr.mxu0 0.0
  %360 = vmatpush1.msra.mxu0 %v337
  %361 = vmatprep.subr.mxu0 0.0
  %362 = vmatpush1.msra.mxu0 0.0
  %363 = vmatprep.subr.mxu0 0.0
  %364 = vmatpush1.msra.mxu0 0.0
  %365 = vmatprep.subr.mxu0 0.0
  %366 = vmatpush1.msra.mxu0 0.0
  %367 = vmatprep.subr.mxu0 0.0
  %368 = vmatpush1.msra.mxu0 0.0
  %369 = vmatprep.subr.mxu0 0.0
  %370 = vmatpush1.msra.mxu0 0.0
  %371 = vmatprep.subr.mxu0 0.0
  %372 = vmatpush1.msra.mxu0 0.0
  %373 = vmatprep.subr.mxu0 0.0
  %374 = vmatpush1.msra.mxu0 0.0
  %375 = vmatprep.subr.mxu0 0.0
  %376 = vmatpush1.msra.mxu0 0.0
  %377 = vmatprep.subr.mxu0 0.0
  %378 = vmatpush1.msra.mxu0 0.0
  %379 = vmatprep.subr.mxu0 0.0
  %380 = vmatpush1.msra.mxu0 0.0
  %381 = vmatprep.subr.mxu0 0.0
  %382 = vmatpush1.msra.mxu0 0.0
  %383 = vmatprep.subr.mxu0 0.0
  %384 = vmatpush1.msra.mxu0 0.0
  %385 = vmatprep.subr.mxu0 0.0
  %386 = vmatpush1.msra.mxu0 0.0
  %387 = vmatprep.subr.mxu0 0.0
  %388 = vmatpush1.msra.mxu0 0.0
  %389 = vmatprep.subr.mxu0 0.0
  %390 = vmatpush1.msra.mxu0 0.0
  %391 = vmatprep.subr.mxu0 0.0
  %392 = vmatpush1.msra.mxu0 0.0
  %393 = vmatprep.subr.mxu0 0.0
  %394 = vmatpush1.msra.mxu0 0.0
  %395 = vmatprep.subr.mxu0 0.0
  %396 = vmatpush1.msra.mxu0 0.0
  %397 = vmatprep.subr.mxu0 0.0
  %398 = vmatpush1.msra.mxu0 0.0
  %399 = vmatprep.subr.mxu0 0.0
  %400 = vmatpush1.msra.mxu0 0.0
  %401 = vmatprep.subr.mxu0 0.0
  %402 = vmatpush1.msra.mxu0 0.0
  %403 = vmatprep.subr.mxu0 0.0
  %404 = vmatpush1.msra.mxu0 0.0
  %405 = vmatprep.subr.mxu0 0.0
  %406 = vmatpush1.msra.mxu0 0.0
  %407 = vmatprep.subr.mxu0 0.0
  %408 = vmatpush1.msra.mxu0 0.0
  %409 = vmatprep.subr.mxu0 0.0
  %410 = vmatpush1.msra.mxu0 0.0
  %411 = vmatprep.subr.mxu0 0.0
  %412 = vmatpush1.msra.mxu0 0.0
  %413 = vmatprep.subr.mxu0 0.0
  %414 = vmatpush1.msra.mxu0 0.0
  %415 = vmatprep.subr.mxu0 0.0
  %416 = vmatpush1.msra.mxu0 0.0
  %417 = vmatprep.subr.mxu0 0.0
  %418 = vmatpush1.msra.mxu0 0.0
  %419 = vmatprep.subr.mxu0 0.0
  %420 = vmatpush1.msra.mxu0 0.0
  %421 = vmatprep.subr.mxu0 0.0
  %422 = vmatpush1.msra.mxu0 0.0
  %423 = vmatprep.mubr.f32.mxu0 0.0
  %424 = vmatmul.mubr.f32.gmra.mrb[0].mxu0 %v354
  %v425 = vpop.f32.mrb[0].mxu0
  %v426 = vadd.f32 %v345, %v425
  %v427 = vpop.f32.mrb[0].mxu0
  %428 = vmatprep.mubr.f32.mxu0 0.0
  %429 = vmatmul.mubr.f32.gmra.mrb[0].mxu0 %v357
  %v430 = vpop.f32.mrb[0].mxu0
  %v431 = vadd.f32 %v350, %v430
  %v432 = vpop.f32.mrb[0].mxu0
  %433 = vdwg.mxu0
  %v434 = vadd.f32 %v332, %v426
  %v435 = vadd.f32 %v333, %v431
  %v436 = vmax.f32 %v434, 0.0
  %v437 = vmax.f32 %v435, 0.0
  %438 = vst [vmem:[%s7] sm:$0xff] %v436
  %439 = vst [vmem:[%s7 + $0x8] sm:$0xff] %v437
  // Predicated region
  $region30: #{cnn_block_forward.1} parent=0 // pred_check
    _
  $region31: #{cnn_block_forward.1} parent=0 // pred_check_branch
    %441 = sbr.rel (0) target = $region33
  $region32: #{cnn_block_forward.1} parent=0 // pred_region
    _
  $region33: #{cnn_block_forward.1} parent=0 // pred_fallthru
    _
  // Predicated region
  $region34: #{cnn_block_forward.1} parent=0 // pred_check
    _
  $region35: #{cnn_block_forward.1} parent=0 // pred_check_branch
    %443 = sbr.rel (0) target = $region37
  $region36: #{cnn_block_forward.1} parent=0 // pred_region
    _
  $region37: #{cnn_block_forward.1} parent=0 // pred_fallthru
    _

</llo_original>
